<compile_context>
chip_gen: v7x
topology: tpu7x:2x2x1
jax: 0.10.0
libtpu: 0.0.40
codegen_flags: <defaults>
</compile_context>

<pallas_src>
import jax
import jax.numpy as jnp
from jax.experimental import pallas as pl
from jax.experimental.pallas import tpu as pltpu


def _mtl_loss_kernel(losses_ref, log_vars_ref, out_ref):
    # losses_ref, log_vars_ref: (1, num_tasks) f32 VMEM tiles (full-array blocks).
    ls = losses_ref[...]     # single clean vector load
    lv = log_vars_ref[...]   # single clean vector load
    per_task = 0.5 * jnp.exp(-lv) * ls + 0.5 * lv
    # Lane reduce over the logical (1, num_tasks) shape (XLU op, co-issues
    # with the EUP exp); scalar lands directly in SMEM.
    out_ref[0, 0] = jnp.sum(per_task)


def _forward_impl(losses, log_vars):
    num_tasks = losses.shape[0]
    losses2d = losses.astype(jnp.float32).reshape(1, num_tasks)
    log_vars2d = log_vars.astype(jnp.float32).reshape(1, num_tasks)

    cost = pl.CostEstimate(
        flops=4 * num_tasks,
        transcendentals=num_tasks,
        bytes_accessed=2 * 4 * num_tasks + 4,
    )

    out = pl.pallas_call(
        _mtl_loss_kernel,
        out_shape=jax.ShapeDtypeStruct((1, 1), jnp.float32),
        in_specs=[
            pl.BlockSpec(memory_space=pltpu.MemorySpace.VMEM),
            pl.BlockSpec(memory_space=pltpu.MemorySpace.VMEM),
        ],
        out_specs=pl.BlockSpec(memory_space=pltpu.MemorySpace.SMEM),
        cost_estimate=cost,
    )(losses2d, log_vars2d)
    return out[0, 0]


@jax.custom_vjp
def _multi_task_loss(losses, log_vars):
    """losses: (num_tasks,) f32, log_vars: (num_tasks,) f32 -> scalar f32."""
    return _forward_impl(losses, log_vars)


def _mtl_fwd(losses, log_vars):
    return _forward_impl(losses, log_vars), (losses, log_vars)


def _mtl_bwd(residuals, g):
    # Pure-JAX backward: 3 elementwise ops on <= num_tasks elements; fuses
    # into the surrounding backward pass (deliberately NOT a Pallas kernel).
    losses, log_vars = residuals
    e = jnp.exp(-log_vars.astype(jnp.float32))
    d_losses = g * 0.5 * e
    d_log_vars = g * (-0.5 * e * losses.astype(jnp.float32) + 0.5)
    return d_losses.astype(losses.dtype), d_log_vars.astype(log_vars.dtype)


_multi_task_loss.defvjp(_mtl_fwd, _mtl_bwd)

# Jit the public entry so the reshape/cast HLOs fuse around the custom call.
multi_task_loss = jax.jit(_multi_task_loss)


class MultiTaskLossWrapperPallas:
    """Mirrors the PyTorch module: log_vars parameter initialized to zeros."""

    def __init__(self, num_tasks=3):
        self.num_tasks = num_tasks
        # nn.Parameter(torch.zeros(num_tasks)) -> deterministic zero init
        self.log_vars = jnp.zeros((num_tasks,), dtype=jnp.float32)

    def __call__(self, losses_list):
        # losses_list: python list/tuple of scalar losses (like the torch list)
        losses = jnp.stack([jnp.asarray(l, dtype=jnp.float32) for l in losses_list])
        return multi_task_loss(losses, self.log_vars)


if __name__ == "__main__":
    num_tasks = 3
    key = jax.random.PRNGKey(0)

    # Simulate three scalar task losses (e.g. outputs of three loss heads).
    raw = jax.random.uniform(key, (num_tasks,), dtype=jnp.float32) * 2.0
    losses_list = [raw[i] for i in range(num_tasks)]

    wrapper = MultiTaskLossWrapperPallas(num_tasks=num_tasks)
    total = wrapper(losses_list)
    total = jax.block_until_ready(total)

    # Pure-JAX reference check of the same formula (forward).
    ref = jnp.sum(0.5 * jnp.exp(-wrapper.log_vars) * raw + 0.5 * wrapper.log_vars)
    assert jnp.allclose(total, ref, rtol=1e-6, atol=1e-6), (total, ref)

    # Gradient check (custom_vjp analytic backward vs. closed form).
    g_losses, g_logvars = jax.grad(multi_task_loss, argnums=(0, 1))(
        raw, wrapper.log_vars
    )
    e = jnp.exp(-wrapper.log_vars)
    assert jnp.allclose(g_losses, 0.5 * e, rtol=1e-6, atol=1e-6)
    assert jnp.allclose(g_logvars, -0.5 * e * raw + 0.5, rtol=1e-6, atol=1e-6)

    print("KERNEL_OK")
</pallas_src>

<mosaic_0001>
module attributes {stable_mosaic.version = 11 : i64} {
  func.func @_mtl_loss_kernel(%arg0: memref<1x3xf32, #tpu.memory_space<vmem>>, %arg1: memref<1x3xf32, #tpu.memory_space<vmem>>, %arg2: memref<1x1xf32, #tpu.memory_space<smem>>) attributes {dimension_semantics = [], scalar_prefetch = 0 : i64, scratch_operands = 0 : i64, tpu.core_type = #tpu.core_type<tc>} {
    %c0 = arith.constant 0 : index
    %c0_0 = arith.constant 0 : index
    %0 = vector.load %arg0[%c0, %c0_0] : memref<1x3xf32, #tpu.memory_space<vmem>>, vector<1x3xf32>
    %c0_1 = arith.constant 0 : index
    %c0_2 = arith.constant 0 : index
    %1 = vector.load %arg1[%c0_1, %c0_2] : memref<1x3xf32, #tpu.memory_space<vmem>>, vector<1x3xf32>
    %cst = arith.constant 0.000000e+00 : f32
    %2 = vector.broadcast %cst : f32 to vector<1x3xf32>
    %3 = arith.subf %2, %1 : vector<1x3xf32>
    %4 = math.exp %3 : vector<1x3xf32>
    %cst_3 = arith.constant 5.000000e-01 : f32
    %5 = vector.broadcast %cst_3 : f32 to vector<1x3xf32>
    %6 = arith.mulf %5, %4 : vector<1x3xf32>
    %7 = arith.mulf %6, %0 : vector<1x3xf32>
    %cst_4 = arith.constant 5.000000e-01 : f32
    %8 = vector.broadcast %cst_4 : f32 to vector<1x3xf32>
    %9 = arith.mulf %8, %1 : vector<1x3xf32>
    %10 = arith.addf %7, %9 : vector<1x3xf32>
    %11 = vector.shape_cast %10 : vector<1x3xf32> to vector<1x1x3xf32>
    %cst_5 = arith.constant dense<0.000000e+00> : vector<1xf32>
    %12 = vector.multi_reduction <add>, %11, %cst_5 [1, 2] : vector<1x1x3xf32> to vector<1xf32>
    %13 = vector.shape_cast %12 : vector<1xf32> to vector<1x1x1xf32>
    %14 = vector.extract %13[0, 0, 0] : f32 from vector<1x1x1xf32>
    %c0_6 = arith.constant 0 : index
    %c0_7 = arith.constant 0 : index
    %15 = memref.load %arg2[%c0_6, %c0_7] : memref<1x1xf32, #tpu.memory_space<smem>>
    memref.store %14, %arg2[%c0_6, %c0_7] : memref<1x1xf32, #tpu.memory_space<smem>>
    return
  }
}

</mosaic_0001>

<llo_original>
// kernel: _multi_task_loss.1
$region0: #{_multi_task_loss.1}
  #allocation0 [shape = 'u32[]', space=smem, size = 0x4, offset = 0x4, fixed_abs, tag = 'smem constant byte address 0x4 - core index']
  #allocation1 [shape = 'u32[144,128]{1,0:T(1,128)}', space=vmem, size = 0x12000, scoped, tag = 'internal scratch']
  %s0 = inlined_call_operand.vmem [shape: f32[1,3], index: 0, kind: input, shape index: {}]
  %s1 = inlined_call_operand.vmem [shape: f32[1,3], index: 1, kind: input, shape index: {}]
  %s2 = inlined_call_operand.hbm [shape: f32[1,1], index: 2, kind: output, shape index: {}]
  %s3 = sld [smem:[#allocation0]]
  $region18: #{_multi_task_loss.1} parent=0
    _
  %s5 = ssub.s32 1, %s3
  %s6 = scalar_select 0, %s5, %s3
  $region1: #{_multi_task_loss.1} parent=0
    #allocation2 [shape = 'u8[512]{0}', space=smem, size = 0x200, scoped, tag = 'output window, operand 0, single buffered']
    #allocation3 [shape = 's32[1]{0}', space=sflag, size = 0x4, scoped, tag = 'scoped memory for _multi_task_loss.1']
    %7 = vsyncpa [#allocation3], 0
    // Predicated region
    $region2: #{_multi_task_loss.1} parent=1 // pred_check
      _
    $region3: #{_multi_task_loss.1} parent=1 // pred_check_branch
      %9 = sbr.rel (0) target = $region5
    $region4: #{_multi_task_loss.1} parent=1 // pred_region
      _
    $region5: #{_multi_task_loss.1} parent=1 // pred_fallthru
      _
    // Predicated region
    $region6: #{_multi_task_loss.1} parent=1 // pred_check
      _
    $region7: #{_multi_task_loss.1} parent=1 // pred_check_branch
      %11 = sbr.rel (0) target = $region9
    $region8: #{_multi_task_loss.1} parent=1 // pred_region
      _
    $region9: #{_multi_task_loss.1} parent=1 // pred_fallthru
      _
    %v12 = vld [vmem:[%s0] sm:$0x1]
    %v13 = vld [vmem:[%s1] sm:$0x1]
    %v14 = vsub.f32 0.0, %v13
    %v15 = vmul.f32 %v14, 1.442695
    %v16 = vpow.pop %v15
    %v17 = vmul.f32 %v16, 0.5
    %v18 = vmul.f32 %v17, %v12
    %v19 = vmul.f32 %v13, 0.5
    %v20 = vadd.f32 %v18, %v19
    %vm21 = vcmask 16384
    %v22 = vsel %vm21, %v20, 0.0
    %23 = vadd.xlane.f32.xlu0 %v22
    %v24 = vpop.xlane.xlu0 %23
    %v25 = vrot.slane %v24, 4
    %v26 = vadd.f32 %v24, %v25
    %v27 = vrot.slane %v26, 2
    %v28 = vadd.f32 %v26, %v27
    %v29 = vrot.slane %v28, 1
    %v30 = vadd.f32 %v28, %v29
    %s31 = vtos %v30
    %s32 = scalar_lea.smem [#allocation2], 0
    %33 = sst [smem:[%s32]] %s31
    // Predicated region
    $region10: #{_multi_task_loss.1} parent=1 // pred_check
      _
    $region11: #{_multi_task_loss.1} parent=1 // pred_check_branch
      %35 = sbr.rel (0) target = $region13
    $region12: #{_multi_task_loss.1} parent=1 // pred_region
      %s37 = ssub.s32 16, 16
      %38 = vsyncadd [#allocation3], %s37
      %41 = dma.smem_to_hbm [#allocation2], 16, %s2, [#allocation3]
    $region13: #{_multi_task_loss.1} parent=1 // pred_fallthru
      _
    // Predicated region
    $region14: #{_multi_task_loss.1} parent=1 // pred_check
      _
    $region15: #{_multi_task_loss.1} parent=1 // pred_check_branch
      %43 = sbr.rel (0) target = $region17
    $region16: #{_multi_task_loss.1} parent=1 // pred_region
      %44 = dma.done [#allocation3], 16
    $region17: #{_multi_task_loss.1} parent=1 // pred_fallthru
      _
    %45 = sfence
    %46 = vsyncpa [#allocation3], 1

</llo_original>
